<compile_context>
chip_gen: v7x
topology: tpu7x:2x2x1
jax: 0.10.0
libtpu: 0.0.40
codegen_flags: <defaults>
</compile_context>

<pallas_src>
import functools

import jax
import jax.numpy as jnp
from jax.experimental import pallas as pl
from jax.experimental.pallas import tpu as pltpu


# -----------------------------------------------------------------------------
# Generation-aware VMEM budgeting.
# -----------------------------------------------------------------------------
def _vmem_capacity_bytes():
    try:
        return int(pltpu.get_tpu_info().vmem_capacity_bytes)
    except Exception:
        return 64 * 1024 * 1024          # conservative fallback (v7x-sized VMEM)


def _budgets():
    """Returns (vmem_limit_bytes, per_block_budget_bytes)."""
    cap = _vmem_capacity_bytes()
    if cap >= 96 * 1024 * 1024:          # v5e / v6e: 128 MiB physical VMEM
        return 96 * 1024 * 1024, 12 * 1024 * 1024
    # v7x: 64 MiB physical VMEM -> keep the scoped limit and blocks smaller.
    return 44 * 1024 * 1024, 6 * 1024 * 1024


def _pick_hw_tile(hw, c, itemsize, block_budget):
    """Largest 128-multiple lane tile whose (1, C, tile) block fits the budget."""
    hw128 = pl.cdiv(hw, 128) * 128
    max_tile = (block_budget // max(1, c * itemsize)) // 128 * 128
    return int(max(128, min(max_tile, hw128)))


# -----------------------------------------------------------------------------
# Fused single-pass kernel: pool + MLP + scale for one image per grid step.
#   x block (1, C, HW) -> out block (1, C, HW); weights are tiny constant blocks.
# -----------------------------------------------------------------------------
def _fused_kernel(x_ref, w1_ref, b1_ref, w2_ref, b2_ref, o_ref, *, inv_hw):
    x = x_ref[...]                                                # (1, C, HW)
    pooled = jnp.sum(x.astype(jnp.float32), axis=-1) * inv_hw     # (1, C) mean
    h = jnp.dot(pooled, w1_ref[...], preferred_element_type=jnp.float32) + b1_ref[...]
    h = jnp.maximum(h, 0.0)
    z = jnp.dot(h, w2_ref[...], preferred_element_type=jnp.float32) + b2_ref[...]
    exc = jax.nn.sigmoid(z).astype(x.dtype)                       # (1, C) in x dtype
    o_ref[...] = x * exc[:, :, None]


def _fused_forward(x3, w1, b1, w2, b2, inv_hw, vmem_limit):
    B, C, HW = x3.shape
    S = w1.shape[1]
    kernel = functools.partial(_fused_kernel, inv_hw=inv_hw)
    return pl.pallas_call(
        kernel,
        out_shape=jax.ShapeDtypeStruct((B, C, HW), x3.dtype),
        grid_spec=pltpu.PrefetchScalarGridSpec(
            num_scalar_prefetch=0,
            grid=(B,),
            in_specs=[
                pl.BlockSpec((1, C, HW), lambda b: (b, 0, 0)),
                pl.BlockSpec((C, S), lambda b: (0, 0)),
                pl.BlockSpec((1, S), lambda b: (0, 0)),
                pl.BlockSpec((S, C), lambda b: (0, 0)),
                pl.BlockSpec((1, C), lambda b: (0, 0)),
            ],
            out_specs=pl.BlockSpec((1, C, HW), lambda b: (b, 0, 0)),
        ),
        compiler_params=pltpu.CompilerParams(
            dimension_semantics=("parallel",),
            vmem_limit_bytes=vmem_limit,
        ),
    )(x3, w1, b1, w2, b2)


# -----------------------------------------------------------------------------
# Tiled path, kernel 1: global sum pool with the excitation MLP folded into the
# last reduction step.  grid = (B, cdiv(HW, tile)); ragged tail masked in-kernel.
# -----------------------------------------------------------------------------
def _pool_mlp_kernel(x_ref, w1_ref, b1_ref, w2_ref, b2_ref, exc_ref, acc_ref,
                     *, hw, tile, inv_hw):
    s = pl.program_id(1)

    @pl.when(s == 0)
    def _():
        acc_ref[...] = jnp.zeros_like(acc_ref)

    x = x_ref[...].astype(jnp.float32)                            # (1, C, tile)
    if hw % tile != 0:                    # static: mask OOB lanes of the tail tile
        lane = jax.lax.broadcasted_iota(jnp.int32, x.shape, 2)
        x = jnp.where(s * tile + lane < hw, x, 0.0)
    acc_ref[...] += jnp.sum(x, axis=-1)                           # (1, C) f32 sums

    @pl.when(s == pl.num_programs(1) - 1)
    def _():
        mean = acc_ref[...] * inv_hw                              # (1, C)
        h = jnp.dot(mean, w1_ref[...], preferred_element_type=jnp.float32) + b1_ref[...]
        h = jnp.maximum(h, 0.0)
        z = jnp.dot(h, w2_ref[...], preferred_element_type=jnp.float32) + b2_ref[...]
        exc_ref[...] = jax.nn.sigmoid(z)[:, :, None].astype(exc_ref.dtype)


def _pool_excitation(x3, w1, b1, w2, b2, tile, inv_hw, vmem_limit):
    B, C, HW = x3.shape
    S = w1.shape[1]
    n = pl.cdiv(HW, tile)
    kernel = functools.partial(_pool_mlp_kernel, hw=HW, tile=tile, inv_hw=inv_hw)
    return pl.pallas_call(
        kernel,
        out_shape=jax.ShapeDtypeStruct((B, C, 1), x3.dtype),
        grid_spec=pltpu.PrefetchScalarGridSpec(
            num_scalar_prefetch=0,
            grid=(B, n),
            in_specs=[
                pl.BlockSpec((1, C, tile), lambda b, s: (b, 0, s)),
                pl.BlockSpec((C, S), lambda b, s: (0, 0)),
                pl.BlockSpec((1, S), lambda b, s: (0, 0)),
                pl.BlockSpec((S, C), lambda b, s: (0, 0)),
                pl.BlockSpec((1, C), lambda b, s: (0, 0)),
            ],
            out_specs=pl.BlockSpec((1, C, 1), lambda b, s: (b, 0, 0)),
            scratch_shapes=[pltpu.VMEM((1, C), jnp.float32)],
        ),
        compiler_params=pltpu.CompilerParams(
            dimension_semantics=("parallel", "arbitrary"),
            vmem_limit_bytes=vmem_limit,
        ),
    )(x3, w1, b1, w2, b2)


# -----------------------------------------------------------------------------
# Tiled path, kernel 2: out[b, c, :] = x[b, c, :] * exc[b, c]   (lane-dense)
# -----------------------------------------------------------------------------
def _scale_kernel(x_ref, e_ref, o_ref):
    o_ref[...] = x_ref[...] * e_ref[...]


def _scale(x3, exc3, tile, vmem_limit, donate_input=False):
    B, C, HW = x3.shape
    n = pl.cdiv(HW, tile)
    return pl.pallas_call(
        _scale_kernel,
        out_shape=jax.ShapeDtypeStruct((B, C, HW), x3.dtype),
        grid_spec=pltpu.PrefetchScalarGridSpec(
            num_scalar_prefetch=0,
            grid=(B, n),
            in_specs=[
                pl.BlockSpec((1, C, tile), lambda b, s: (b, 0, s)),
                pl.BlockSpec((1, C, 1), lambda b, s: (b, 0, 0)),
            ],
            out_specs=pl.BlockSpec((1, C, tile), lambda b, s: (b, 0, s)),
        ),
        input_output_aliases=({0: 0} if donate_input else {}),
        compiler_params=pltpu.CompilerParams(
            dimension_semantics=("parallel", "parallel"),
            vmem_limit_bytes=vmem_limit,
        ),
    )(x3, exc3)


# -----------------------------------------------------------------------------
# SqueezeExcitation module
# -----------------------------------------------------------------------------
class SqueezeExcitationPallas:
    """x (NCHW) -> x * sigmoid(fc2(relu(fc1(avg_pool(x)))))  (NCHW)."""

    def __init__(self, input_channels, se_channels, key=None):
        key = jax.random.PRNGKey(0) if key is None else key
        k1, k2, k3, k4 = jax.random.split(key, 4)
        # PyTorch Conv2d default init: U(-1/sqrt(fan_in), 1/sqrt(fan_in)).
        s1 = 1.0 / (input_channels ** 0.5)
        s2 = 1.0 / (se_channels ** 0.5)
        self.w1 = jax.random.uniform(k1, (input_channels, se_channels), jnp.float32, -s1, s1)
        self.b1 = jax.random.uniform(k2, (1, se_channels), jnp.float32, -s1, s1)
        self.w2 = jax.random.uniform(k3, (se_channels, input_channels), jnp.float32, -s2, s2)
        self.b2 = jax.random.uniform(k4, (1, input_channels), jnp.float32, -s2, s2)
        self.input_channels = input_channels
        self.se_channels = se_channels

    def __call__(self, x_nchw, *, donate_input=False, force_tiled=False,
                 tile_override=None):
        B, C, H, W = x_nchw.shape
        assert C == self.input_channels
        hw = H * W
        itemsize = jnp.dtype(x_nchw.dtype).itemsize
        inv_hw = 1.0 / float(hw)

        x3 = x_nchw.reshape(B, C, hw)          # free: merges trailing contiguous dims
        vmem_limit, block_budget = _budgets()

        weight_bytes = 4 * int(self.w1.size + self.b1.size + self.w2.size + self.b2.size)
        slab_bytes = C * hw * itemsize         # one image's (C, HW) slab
        # Fused needs ~2 in + 2 out slabs double-buffered plus f32 temporaries;
        # budget 6x the slab plus weights and headroom to be safe on all parts.
        fused_ok = (6 * slab_bytes + 2 * weight_bytes + (4 << 20)) <= vmem_limit

        if fused_ok and not force_tiled:
            y3 = _fused_forward(x3, self.w1, self.b1, self.w2, self.b2,
                                inv_hw, vmem_limit)
        else:
            tile = tile_override or _pick_hw_tile(hw, C, itemsize, block_budget)
            exc3 = _pool_excitation(x3, self.w1, self.b1, self.w2, self.b2,
                                    tile, inv_hw, vmem_limit)      # (B, C, 1), x dtype
            y3 = _scale(x3, exc3, tile, vmem_limit, donate_input)
        return y3.reshape(B, C, H, W)


# -----------------------------------------------------------------------------
if __name__ == "__main__":
    key = jax.random.PRNGKey(0)
    kx, kx2, kp = jax.random.split(key, 3)

    B, C, SE_CH = 2, 64, 16
    se = SqueezeExcitationPallas(input_channels=C, se_channels=SE_CH, key=kp)

    def reference(x):
        pooled = jnp.mean(x, axis=(2, 3))                              # (B, C)
        h = jnp.maximum(pooled @ se.w1 + se.b1, 0.0)
        exc = jax.nn.sigmoid(h @ se.w2 + se.b2)                        # (B, C)
        return x * exc[:, :, None, None]

    # 1) Fused single-pass path (small (C, H*W) slab fits VMEM).
    x = jax.random.normal(kx, (B, C, 16, 16), jnp.float32)
    y = jax.block_until_ready(se(x))
    assert y.shape == x.shape, y.shape
    assert bool(jnp.all(jnp.isfinite(y)))
    err = float(jnp.max(jnp.abs(y - reference(x))))
    assert err < 2e-3, err

    # 2) Tiled pool(+fused MLP) / scale path with a ragged tail:
    #    H*W = 17*17 = 289 lanes, tile 128 -> 3 tiles, 33 valid lanes masked
    #    in the last tile (no wrapper pad/slice).
    x2 = jax.random.normal(kx2, (B, C, 17, 17), jnp.float32)
    y2 = jax.block_until_ready(se(x2, force_tiled=True, tile_override=128))
    assert y2.shape == x2.shape, y2.shape
    err2 = float(jnp.max(jnp.abs(y2 - reference(x2))))
    assert err2 < 2e-3, err2

    print("KERNEL_OK")
</pallas_src>

<mosaic_0001>
module attributes {stable_mosaic.version = 11 : i64} {
  func.func @_fused_kernel(%arg0: i32, %arg1: memref<1x64x256xf32, #tpu.memory_space<vmem>>, %arg2: memref<64x16xf32, #tpu.memory_space<vmem>>, %arg3: memref<1x16xf32, #tpu.memory_space<vmem>>, %arg4: memref<16x64xf32, #tpu.memory_space<vmem>>, %arg5: memref<1x64xf32, #tpu.memory_space<vmem>>, %arg6: memref<1x64x256xf32, #tpu.memory_space<vmem>>) attributes {dimension_semantics = [#tpu.dimension_semantics<parallel>], iteration_bounds = array<i64: 2>, scalar_prefetch = 0 : i64, scratch_operands = 0 : i64, tpu.core_type = #tpu.core_type<tc>, window_params = [{transform_indices = @transform_0, window_bounds = array<i64: 1, 64, 256>}, {pipeline_mode = #tpu.pipeline_mode<synchronous>, transform_indices = @transform_1, window_bounds = array<i64: 64, 16>}, {pipeline_mode = #tpu.pipeline_mode<synchronous>, transform_indices = @transform_2, window_bounds = array<i64: 1, 16>}, {pipeline_mode = #tpu.pipeline_mode<synchronous>, transform_indices = @transform_3, window_bounds = array<i64: 16, 64>}, {pipeline_mode = #tpu.pipeline_mode<synchronous>, transform_indices = @transform_4, window_bounds = array<i64: 1, 64>}, {transform_indices = @transform_5, window_bounds = array<i64: 1, 64, 256>}]} {
    %c0 = arith.constant 0 : index
    %c0_0 = arith.constant 0 : index
    %c0_1 = arith.constant 0 : index
    %0 = vector.load %arg1[%c0, %c0_0, %c0_1] : memref<1x64x256xf32, #tpu.memory_space<vmem>>, vector<1x64x256xf32>
    %cst = arith.constant dense<0.000000e+00> : vector<1x64xf32>
    %1 = vector.multi_reduction <add>, %0, %cst [2] : vector<1x64x256xf32> to vector<1x64xf32>
    %cst_2 = arith.constant 3.906250e-03 : f32
    %2 = vector.broadcast %cst_2 : f32 to vector<1x64xf32>
    %3 = arith.mulf %1, %2 : vector<1x64xf32>
    %c0_3 = arith.constant 0 : index
    %c0_4 = arith.constant 0 : index
    %4 = vector.load %arg2[%c0_3, %c0_4] : memref<64x16xf32, #tpu.memory_space<vmem>>, vector<64x16xf32>
    %cst_5 = arith.constant dense<0.000000e+00> : vector<1x16xf32>
    %5 = tpu.matmul %3, %4, %cst_5 {dimension_numbers = #tpu.dot_dimension_numbers<[1], [0], [0], [1], [0, 0, 1, 1], [], []>} : vector<1x64xf32>, vector<64x16xf32>, vector<1x16xf32> -> vector<1x16xf32>
    %c0_6 = arith.constant 0 : index
    %c0_7 = arith.constant 0 : index
    %6 = vector.load %arg3[%c0_6, %c0_7] : memref<1x16xf32, #tpu.memory_space<vmem>>, vector<1x16xf32>
    %7 = arith.addf %5, %6 : vector<1x16xf32>
    %cst_8 = arith.constant 0.000000e+00 : f32
    %8 = vector.broadcast %cst_8 : f32 to vector<1x16xf32>
    %9 = arith.maximumf %7, %8 : vector<1x16xf32>
    %c0_9 = arith.constant 0 : index
    %c0_10 = arith.constant 0 : index
    %10 = vector.load %arg4[%c0_9, %c0_10] : memref<16x64xf32, #tpu.memory_space<vmem>>, vector<16x64xf32>
    %cst_11 = arith.constant dense<0.000000e+00> : vector<1x64xf32>
    %11 = tpu.matmul %9, %10, %cst_11 {dimension_numbers = #tpu.dot_dimension_numbers<[1], [0], [0], [1], [0, 0, 1, 1], [], []>} : vector<1x16xf32>, vector<16x64xf32>, vector<1x64xf32> -> vector<1x64xf32>
    %c0_12 = arith.constant 0 : index
    %c0_13 = arith.constant 0 : index
    %12 = vector.load %arg5[%c0_12, %c0_13] : memref<1x64xf32, #tpu.memory_space<vmem>>, vector<1x64xf32>
    %13 = arith.addf %11, %12 : vector<1x64xf32>
    %14 = arith.negf %13 : vector<1x64xf32>
    %15 = math.exp %14 : vector<1x64xf32>
    %cst_14 = arith.constant 1.000000e+00 : f32
    %16 = vector.broadcast %cst_14 : f32 to vector<1x64xf32>
    %17 = arith.addf %16, %15 : vector<1x64xf32>
    %18 = arith.divf %16, %17 : vector<1x64xf32>
    %19 = vector.shape_cast %18 : vector<1x64xf32> to vector<1x64x1xf32>
    %20 = vector.broadcast %19 : vector<1x64x1xf32> to vector<1x64x256xf32>
    %21 = arith.mulf %0, %20 : vector<1x64x256xf32>
    %c0_15 = arith.constant 0 : index
    %c0_16 = arith.constant 0 : index
    %c0_17 = arith.constant 0 : index
    %22 = vector.load %arg6[%c0_15, %c0_16, %c0_17] : memref<1x64x256xf32, #tpu.memory_space<vmem>>, vector<1x64x256xf32>
    tpu.vector_store %arg6[%c0_15, %c0_16, %c0_17], %21 {strides = array<i32>} : memref<1x64x256xf32, #tpu.memory_space<vmem>>, vector<1x64x256xf32>,
    return
  }
  func.func @transform_0(%arg0: i32) -> (i32, i32, i32) {
    %c0_i32 = arith.constant 0 : i32
    %c0_i32_0 = arith.constant 0 : i32
    %c0_i32_1 = arith.constant 0 : i32
    return %arg0, %c0_i32, %c0_i32_0 : i32, i32, i32
  }
  func.func @transform_1(%arg0: i32) -> (i32, i32) {
    %c0_i32 = arith.constant 0 : i32
    %c0_i32_0 = arith.constant 0 : i32
    %c0_i32_1 = arith.constant 0 : i32
    return %c0_i32, %c0_i32_0 : i32, i32
  }
  func.func @transform_2(%arg0: i32) -> (i32, i32) {
    %c0_i32 = arith.constant 0 : i32
    %c0_i32_0 = arith.constant 0 : i32
    %c0_i32_1 = arith.constant 0 : i32
    return %c0_i32, %c0_i32_0 : i32, i32
  }
  func.func @transform_3(%arg0: i32) -> (i32, i32) {
    %c0_i32 = arith.constant 0 : i32
    %c0_i32_0 = arith.constant 0 : i32
    %c0_i32_1 = arith.constant 0 : i32
    return %c0_i32, %c0_i32_0 : i32, i32
  }
  func.func @transform_4(%arg0: i32) -> (i32, i32) {
    %c0_i32 = arith.constant 0 : i32
    %c0_i32_0 = arith.constant 0 : i32
    %c0_i32_1 = arith.constant 0 : i32
    return %c0_i32, %c0_i32_0 : i32, i32
  }
  func.func @transform_5(%arg0: i32) -> (i32, i32, i32) {
    %c0_i32 = arith.constant 0 : i32
    %c0_i32_0 = arith.constant 0 : i32
    %c0_i32_1 = arith.constant 0 : i32
    return %arg0, %c0_i32, %c0_i32_0 : i32, i32, i32
  }
}

</mosaic_0001>

<llo_original>
// kernel: tpu_custom_call.1
$region0: #{tpu_custom_call.1}
  #allocation0 [shape = 'u32[]', space=smem, size = 0x4, offset = 0x4, fixed_abs, tag = 'smem constant byte address 0x4 - core index']
  #allocation1 [shape = 'u32[144,128]{1,0:T(1,128)}', space=vmem, size = 0x12000, scoped, tag = 'internal scratch']
  %s0 = inlined_call_operand.hbm [shape: f32[2,64,256], index: 0, kind: input, shape index: {}]
  %s1 = inlined_call_operand.vmem [shape: f32[64,16], index: 1, kind: input, shape index: {}]
  %s2 = inlined_call_operand.vmem [shape: f32[1,16], index: 2, kind: input, shape index: {}]
  %s3 = inlined_call_operand.vmem [shape: f32[16,64], index: 3, kind: input, shape index: {}]
  %s4 = inlined_call_operand.vmem [shape: f32[1,64], index: 4, kind: input, shape index: {}]
  %s5 = inlined_call_operand.hbm [shape: f32[2,64,256], index: 5, kind: output, shape index: {}]
  %s6 = sld [smem:[#allocation0]]
  $region57: #{tpu_custom_call.1} parent=0
    _
  %s8 = ssub.s32 1, %s6
  %s9 = scalar_select 0, %s8, %s6
  $region1: #{tpu_custom_call.1} parent=0
    #allocation2 [shape = 'u8[131072]{0}', space=vmem, size = 0x20000, scoped, tag = 'input window, operand 0']
    #allocation3 [shape = 's32[2]{0}', space=sflag, size = 0x8, scoped, tag = 'scoped memory for tpu_custom_call.1']
    #allocation4 [shape = 's32[2]{0}', space=sflag, size = 0x8, scoped, tag = 'scoped memory for tpu_custom_call.1']
    #allocation5 [shape = 'u8[131072]{0}', space=vmem, size = 0x20000, scoped, tag = 'output window, operand 0']
    %10 = vsyncpa [#allocation3], 0
    %s11 = scalar_lea.sflag [#allocation3], 1
    %12 = vsyncpa %s11, 0
    %13 = vsyncpa [#allocation4], 0
    %s14 = scalar_lea.sflag [#allocation4], 1
    %15 = vsyncpa %s14, 0
    loop: start=0, step=1, limit=4
    $region2: #{tpu_custom_call.1} parent=1 // loop_pre_header
      _
    $region3: #{tpu_custom_call.1} parent=1 // loop_header
      %s17 = sphi 0, %s21
      %p18 = scmp.ge.s32.totalorder %s17, 4
      %s27 = sphi 0, %s29
      %s30 = sphi 0, %s27
      %s31 = sphi 0, %s30
      %s47 = sphi 0, %s31
      %s51 = sphi 0, %s51
      %s53 = sphi 0, %s51
      %s54 = sphi 0, %s53
      %s68 = sphi 0, %s54
      %s72 = sphi 0, %s72
      %s74 = sphi 0, %s72
      %s75 = sphi 0, %s74
      %s89 = sphi 0, %s75
      %s93 = sphi 0, %s93
      %s95 = sphi 0, %s93
      %s96 = sphi 0, %s95
      %s110 = sphi 0, %s96
      %s114 = sphi 0, %s114
      %s116 = sphi 0, %s114
      %s117 = sphi 0, %s116
      %s131 = sphi 0, %s117
      %s137 = sphi 0, %s139
      %s140 = sphi 0, %s137
      %s141 = sphi 0, %s140
      %s157 = sphi 0, %s141
    $region4: #{tpu_custom_call.1} parent=1 // loop_header_branch
      %20 = sbr.rel (%p18) target = $region8
    $region5: #{tpu_custom_call.1} parent=1 // loop_body
      %s22 = ssub.s32 %s17, 1
      %s23 = ssub.s32 %s17, 2
      %s24 = sadd.s32 %s17, 1
      %s25 = ssub.s32 %s17, %s24
      %p26 = scmp.eq.s32.totalorder %s25, 0
      %s28 = sadd.s32 %s27, 1
      %s29 = scalar_select %p26, %s27, %s28
      %p32 = pneg %p26
      %p33 = scmp.eq.s32.totalorder %s17, 1
      %p34 = por %p32, %p33
      %p35 = scmp.ne.s32.totalorder %s27, %s30
      %p36 = scmp.eq.s32.totalorder %s17, 0
      %p37 = por %p35, %p36
      %p38 = scmp.ne.s32.totalorder %s27, %s30
      %p39 = scmp.eq.s32.totalorder %s22, 1
      %p40 = por %p38, %p39
      %p41 = scmp.ne.s32.totalorder %s30, %s31
      %p42 = scmp.eq.s32.totalorder %s22, 0
      %p43 = por %p41, %p42
      %p44 = scmp.ne.s32.totalorder %s30, %s31
      %p45 = scmp.eq.s32.totalorder %s23, 1
      %p46 = por %p44, %p45
      %p48 = scmp.ne.s32.totalorder %s31, %s47
      %p49 = scmp.eq.s32.totalorder %s23, 0
      %p50 = por %p48, %p49
      %s52 = sadd.s32 %s51, 1
      %p55 = scmp.eq.s32.totalorder %s17, 1
      %p56 = scmp.ne.s32.totalorder %s51, %s53
      %p57 = scmp.eq.s32.totalorder %s17, 0
      %p58 = por %p56, %p57
      %p59 = scmp.ne.s32.totalorder %s51, %s53
      %p60 = scmp.eq.s32.totalorder %s22, 1
      %p61 = por %p59, %p60
      %p62 = scmp.ne.s32.totalorder %s53, %s54
      %p63 = scmp.eq.s32.totalorder %s22, 0
      %p64 = por %p62, %p63
      %p65 = scmp.ne.s32.totalorder %s53, %s54
      %p66 = scmp.eq.s32.totalorder %s23, 1
      %p67 = por %p65, %p66
      %p69 = scmp.ne.s32.totalorder %s54, %s68
      %p70 = scmp.eq.s32.totalorder %s23, 0
      %p71 = por %p69, %p70
      %s73 = sadd.s32 %s72, 1
      %p76 = scmp.eq.s32.totalorder %s17, 1
      %p77 = scmp.ne.s32.totalorder %s72, %s74
      %p78 = scmp.eq.s32.totalorder %s17, 0
      %p79 = por %p77, %p78
      %p80 = scmp.ne.s32.totalorder %s72, %s74
      %p81 = scmp.eq.s32.totalorder %s22, 1
      %p82 = por %p80, %p81
      %p83 = scmp.ne.s32.totalorder %s74, %s75
      %p84 = scmp.eq.s32.totalorder %s22, 0
      %p85 = por %p83, %p84
      %p86 = scmp.ne.s32.totalorder %s74, %s75
      %p87 = scmp.eq.s32.totalorder %s23, 1
      %p88 = por %p86, %p87
      %p90 = scmp.ne.s32.totalorder %s75, %s89
      %p91 = scmp.eq.s32.totalorder %s23, 0
      %p92 = por %p90, %p91
      %s94 = sadd.s32 %s93, 1
      %p97 = scmp.eq.s32.totalorder %s17, 1
      %p98 = scmp.ne.s32.totalorder %s93, %s95
      %p99 = scmp.eq.s32.totalorder %s17, 0
      %p100 = por %p98, %p99
      %p101 = scmp.ne.s32.totalorder %s93, %s95
      %p102 = scmp.eq.s32.totalorder %s22, 1
      %p103 = por %p101, %p102
      %p104 = scmp.ne.s32.totalorder %s95, %s96
      %p105 = scmp.eq.s32.totalorder %s22, 0
      %p106 = por %p104, %p105
      %p107 = scmp.ne.s32.totalorder %s95, %s96
      %p108 = scmp.eq.s32.totalorder %s23, 1
      %p109 = por %p107, %p108
      %p111 = scmp.ne.s32.totalorder %s96, %s110
      %p112 = scmp.eq.s32.totalorder %s23, 0
      %p113 = por %p111, %p112
      %s115 = sadd.s32 %s114, 1
      %p118 = scmp.eq.s32.totalorder %s17, 1
      %p119 = scmp.ne.s32.totalorder %s114, %s116
      %p120 = scmp.eq.s32.totalorder %s17, 0
      %p121 = por %p119, %p120
      %p122 = scmp.ne.s32.totalorder %s114, %s116
      %p123 = scmp.eq.s32.totalorder %s22, 1
      %p124 = por %p122, %p123
      %p125 = scmp.ne.s32.totalorder %s116, %s117
      %p126 = scmp.eq.s32.totalorder %s22, 0
      %p127 = por %p125, %p126
      %p128 = scmp.ne.s32.totalorder %s116, %s117
      %p129 = scmp.eq.s32.totalorder %s23, 1
      %p130 = por %p128, %p129
      %p132 = scmp.ne.s32.totalorder %s117, %s131
      %p133 = scmp.eq.s32.totalorder %s23, 0
      %p134 = por %p132, %p133
      %s135 = ssub.s32 %s17, %s24
      %p136 = scmp.eq.s32.totalorder %s135, 0
      %s138 = sadd.s32 %s137, 1
      %s139 = scalar_select %p136, %s137, %s138
      %p142 = pneg %p136
      %p143 = scmp.eq.s32.totalorder %s17, 1
      %p144 = por %p142, %p143
      %p145 = scmp.ne.s32.totalorder %s137, %s140
      %p146 = scmp.eq.s32.totalorder %s17, 0
      %p147 = por %p145, %p146
      %p148 = scmp.ne.s32.totalorder %s137, %s140
      %p149 = scmp.eq.s32.totalorder %s22, 1
      %p150 = por %p148, %p149
      %p151 = scmp.ne.s32.totalorder %s140, %s141
      %p152 = scmp.eq.s32.totalorder %s22, 0
      %p153 = por %p151, %p152
      %p154 = scmp.ne.s32.totalorder %s140, %s141
      %p155 = scmp.eq.s32.totalorder %s23, 1
      %p156 = por %p154, %p155
      %p158 = scmp.ne.s32.totalorder %s141, %s157
      %p159 = scmp.eq.s32.totalorder %s23, 0
      %p160 = por %p158, %p159
      %p161 = scmp.le.s32.totalorder 1, %s17
      %p162 = scmp.lt.s32.totalorder %s17, 3
      %p163 = pnand %p161, %p162
      %p164 = pneg %p163
      // Predicated region
      $region9: #{tpu_custom_call.1} parent=5 // pred_check
        _
      $region10: #{tpu_custom_call.1} parent=5 // pred_check_branch
        %166 = sbr.rel (%p163) target = $region12
      $region11: #{tpu_custom_call.1} parent=5 // pred_region
        %s167 = ssub.s32 %s17, 1
        // Predicated region
        $region13: #{tpu_custom_call.1} parent=11 // pred_check
          %p168 = pneg %p64
        $region14: #{tpu_custom_call.1} parent=11 // pred_check_branch
          %170 = sbr.rel (%p168) target = $region16
        $region15: #{tpu_custom_call.1} parent=11 // pred_region
          _
        $region16: #{tpu_custom_call.1} parent=11 // pred_fallthru
          _
        // Predicated region
        $region17: #{tpu_custom_call.1} parent=11 // pred_check
          %p171 = pneg %p85
        $region18: #{tpu_custom_call.1} parent=11 // pred_check_branch
          %173 = sbr.rel (%p171) target = $region20
        $region19: #{tpu_custom_call.1} parent=11 // pred_region
          _
        $region20: #{tpu_custom_call.1} parent=11 // pred_fallthru
          _
        // Predicated region
        $region21: #{tpu_custom_call.1} parent=11 // pred_check
          %p174 = pneg %p106
        $region22: #{tpu_custom_call.1} parent=11 // pred_check_branch
          %176 = sbr.rel (%p174) target = $region24
        $region23: #{tpu_custom_call.1} parent=11 // pred_region
          _
        $region24: #{tpu_custom_call.1} parent=11 // pred_fallthru
          _
        // Predicated region
        $region25: #{tpu_custom_call.1} parent=11 // pred_check
          %p177 = pneg %p127
        $region26: #{tpu_custom_call.1} parent=11 // pred_check_branch
          %179 = sbr.rel (%p177) target = $region28
        $region27: #{tpu_custom_call.1} parent=11 // pred_region
          _
        $region28: #{tpu_custom_call.1} parent=11 // pred_fallthru
          _
      $region12: #{tpu_custom_call.1} parent=5 // pred_fallthru
        _
      %p180 = scmp.lt.s32.totalorder %s17, 2
      // Predicated region
      $region29: #{tpu_custom_call.1} parent=5 // pred_check
        %p181 = pneg %p180
      $region30: #{tpu_custom_call.1} parent=5 // pred_check_branch
        %183 = sbr.rel (%p181) target = $region32
      $region31: #{tpu_custom_call.1} parent=5 // pred_region
        // Predicated region
        $region33: #{tpu_custom_call.1} parent=31 // pred_check
          %p184 = pneg %p37
        $region34: #{tpu_custom_call.1} parent=31 // pred_check_branch
          %186 = sbr.rel (%p184) target = $region36
        $region35: #{tpu_custom_call.1} parent=31 // pred_region
          %s187 = sand.u32 %s27, 1
          %s188 = scalar_lea.sflag [#allocation3], %s187
          %s189 = sand.u32 %s27, 1
          %s190 = smul.addr %s189, 128
          %s191 = scalar_lea.vmem [#allocation2], %s190
          %s193 = ssub.s32 2048, 2048
          %194 = vsyncadd %s188, %s193
          %s195 = smul.addr %s17, 16
          %s196 = smul.addr %s195, 128
          %s197 = scalar_lea.hbm %s0, %s196
          %s198 = sshll.u32 %s191, 4
          %s199 = int_to_ptr.vmem [resolvable:$true] %s198
          %204 = dma.hbm_to_vmem [thread:$0]  %s197, 2048, %s199, %s188, 256, 256, 16
        $region36: #{tpu_custom_call.1} parent=31 // pred_fallthru
          _
      $region32: #{tpu_custom_call.1} parent=5 // pred_fallthru
        _
      %p205 = scmp.le.s32.totalorder 1, %s17
      %p206 = scmp.lt.s32.totalorder %s17, 3
      %p207 = pnand %p205, %p206
      %p208 = pneg %p207
      // Predicated region
      $region37: #{tpu_custom_call.1} parent=5 // pred_check
        _
      $region38: #{tpu_custom_call.1} parent=5 // pred_check_branch
        %210 = sbr.rel (%p207) target = $region40
      $region39: #{tpu_custom_call.1} parent=5 // pred_region
        %s211 = ssub.s32 %s17, 1
        %s212 = sand.u32 %s30, 1
        %s213 = scalar_lea.sflag [#allocation3], %s212
        %s214 = sand.u32 %s30, 1
        %s215 = smul.addr %s214, 128
        %s216 = scalar_lea.vmem [#allocation2], %s215
        // Predicated region
        $region41: #{tpu_custom_call.1} parent=39 // pred_check
          %p217 = pneg %p43
        $region42: #{tpu_custom_call.1} parent=39 // pred_check_branch
          %219 = sbr.rel (%p217) target = $region44
        $region43: #{tpu_custom_call.1} parent=39 // pred_region
          %220 = dma.done %s213, 2048
        $region44: #{tpu_custom_call.1} parent=39 // pred_fallthru
          _
        %s221 = sand.u32 %s30, 1
        %s222 = scalar_lea.sflag [#allocation3], %s221
        %s223 = sand.u32 %s30, 1
        %s224 = smul.addr %s223, 128
        %s225 = scalar_lea.vmem [#allocation2], %s224
        %p226 = pneg %p43
        %p227 = pneg %p40
        %p228 = pneg %p64
        %p229 = pneg %p61
        %p230 = pneg %p85
        %p231 = pneg %p82
        %p232 = pneg %p106
        %p233 = pneg %p103
        %p234 = pneg %p127
        %p235 = pneg %p124
        %p236 = pneg %p153
        %p237 = pneg %p150
        %s238 = sand.u32 %s140, 1
        %s239 = scalar_lea.sflag [#allocation4], %s238
        %s240 = sand.u32 %s140, 1
        %s241 = smul.addr %s240, 128
        %s242 = scalar_lea.vmem [#allocation5], %s241
        %v243 = vld [vmem:[%s216] sm:$0xff]
        %v244 = vld [vmem:[%s216 + $0x8] sm:$0xff]
        %v245 = vld [vmem:[%s216 + $0x10] sm:$0xff]
        %v246 = vld [vmem:[%s216 + $0x18] sm:$0xff]
        %v247 = vld [vmem:[%s216 + $0x20] sm:$0xff]
        %v248 = vld [vmem:[%s216 + $0x28] sm:$0xff]
        %v249 = vld [vmem:[%s216 + $0x30] sm:$0xff]
        %v250 = vld [vmem:[%s216 + $0x38] sm:$0xff]
        %v251 = vld [vmem:[%s216 + $0x40] sm:$0xff]
        %v252 = vld [vmem:[%s216 + $0x48] sm:$0xff]
        %v253 = vld [vmem:[%s216 + $0x50] sm:$0xff]
        %v254 = vld [vmem:[%s216 + $0x58] sm:$0xff]
        %v255 = vld [vmem:[%s216 + $0x60] sm:$0xff]
        %v256 = vld [vmem:[%s216 + $0x68] sm:$0xff]
        %v257 = vld [vmem:[%s216 + $0x70] sm:$0xff]
        %v258 = vld [vmem:[%s216 + $0x78] sm:$0xff]
        %v259 = vadd.f32 %v243, %v244
        %260 = vadd.xlane.f32.xlu0 %v259
        %v261 = vpop.xlane.xlu0 %260
        %v262 = vadd.f32 %v245, %v246
        %263 = vadd.xlane.f32.xlu0 %v262
        %v264 = vpop.xlane.xlu0 %263
        %v265 = vadd.f32 %v247, %v248
        %266 = vadd.xlane.f32.xlu0 %v265
        %v267 = vpop.xlane.xlu0 %266
        %v268 = vadd.f32 %v249, %v250
        %269 = vadd.xlane.f32.xlu0 %v268
        %v270 = vpop.xlane.xlu0 %269
        %v271 = vadd.f32 %v251, %v252
        %272 = vadd.xlane.f32.xlu0 %v271
        %v273 = vpop.xlane.xlu0 %272
        %v274 = vadd.f32 %v253, %v254
        %275 = vadd.xlane.f32.xlu0 %v274
        %v276 = vpop.xlane.xlu0 %275
        %v277 = vadd.f32 %v255, %v256
        %278 = vadd.xlane.f32.xlu0 %v277
        %v279 = vpop.xlane.xlu0 %278
        %v280 = vadd.f32 %v257, %v258
        %281 = vadd.xlane.f32.xlu0 %v280
        %v282 = vpop.xlane.xlu0 %281
        %v283 = vmul.f32 %v261, 0.00390625
        %v284 = vmul.f32 %v264, 0.00390625
        %v285 = vmul.f32 %v267, 0.00390625
        %v286 = vmul.f32 %v270, 0.00390625
        %v287 = vmul.f32 %v273, 0.00390625
        %v288 = vmul.f32 %v276, 0.00390625
        %v289 = vmul.f32 %v279, 0.00390625
        %v290 = vmul.f32 %v282, 0.00390625
        %v291 = vld [vmem:[%s1] sm:$0xff]
        %v292 = vld [vmem:[%s1 + $0x8] sm:$0xff]
        %v293 = vld [vmem:[%s1 + $0x10] sm:$0xff]
        %v294 = vld [vmem:[%s1 + $0x18] sm:$0xff]
        %v295 = vld [vmem:[%s1 + $0x20] sm:$0xff]
        %v296 = vld [vmem:[%s1 + $0x28] sm:$0xff]
        %v297 = vld [vmem:[%s1 + $0x30] sm:$0xff]
        %v298 = vld [vmem:[%s1 + $0x38] sm:$0xff]
        %v299 = vld [vmem:[%s2] sm:$0x1]
        %v308 = vlaneseq
        %v309 = vand.u32 %v308, 127
        %v310 = vlaneseq
        %v311 = vshrl.u32 %v310, 7
        %v312 = vsub.s32 %v309, %v311
        %v313 = vrot.slane %v283, %v312
        %v314 = vadd.s32 %v309, 4294967288
        %v315 = vlaneseq
        %v316 = vshrl.u32 %v315, 7
        %v317 = vsub.s32 %v314, %v316
        %v318 = vrot.slane %v284, %v317
        %vm319 = vcmask 130112
        %v320 = vsel %vm319, %v318, %v313
        %v321 = vadd.s32 %v309, 4294967280
        %v322 = vlaneseq
        %v323 = vshrl.u32 %v322, 7
        %v324 = vsub.s32 %v321, %v323
        %v325 = vrot.slane %v285, %v324
        %vm326 = vcmask 195712
        %v327 = vsel %vm326, %v325, %v320
        %v328 = vadd.s32 %v309, 4294967272
        %v329 = vlaneseq
        %v330 = vshrl.u32 %v329, 7
        %v331 = vsub.s32 %v328, %v330
        %v332 = vrot.slane %v286, %v331
        %vm333 = vcmask 261312
        %v334 = vsel %vm333, %v332, %v327
        %v335 = vadd.s32 %v309, 4294967264
        %v336 = vlaneseq
        %v337 = vshrl.u32 %v336, 7
        %v338 = vsub.s32 %v335, %v337
        %v339 = vrot.slane %v287, %v338
        %vm340 = vcmask 326912
        %v341 = vsel %vm340, %v339, %v334
        %v342 = vadd.s32 %v309, 4294967256
        %v343 = vlaneseq
        %v344 = vshrl.u32 %v343, 7
        %v345 = vsub.s32 %v342, %v344
        %v346 = vrot.slane %v288, %v345
        %vm347 = vcmask 392512
        %v348 = vsel %vm347, %v346, %v341
        %v349 = vadd.s32 %v309, 4294967248
        %v350 = vlaneseq
        %v351 = vshrl.u32 %v350, 7
        %v352 = vsub.s32 %v349, %v351
        %v353 = vrot.slane %v289, %v352
        %vm354 = vcmask 458112
        %v355 = vsel %vm354, %v353, %v348
        %v356 = vadd.s32 %v309, 4294967240
        %v357 = vlaneseq
        %v358 = vshrl.u32 %v357, 7
        %v359 = vsub.s32 %v356, %v358
        %v360 = vrot.slane %v290, %v359
        %vm361 = vcmask 523712
        %v362 = vsel %vm361, %v360, %v355
        %vm363 = vcmask 523264
        %v364 = vsel %vm363, %v362, 0
        %366 = vmatprep.subr.mxu0 0.0
        %367 = vmatpush1.msra.mxu0 %v291
        %368 = vmatprep.subr.mxu0 0.0
        %369 = vmatpush1.msra.mxu0 %v292
        %370 = vmatprep.subr.mxu0 0.0
        %371 = vmatpush1.msra.mxu0 %v293
        %372 = vmatprep.subr.mxu0 0.0
        %373 = vmatpush1.msra.mxu0 %v294
        %374 = vmatprep.subr.mxu0 0.0
        %375 = vmatpush1.msra.mxu0 %v295
        %376 = vmatprep.subr.mxu0 0.0
        %377 = vmatpush1.msra.mxu0 %v296
        %378 = vmatprep.subr.mxu0 0.0
        %379 = vmatpush1.msra.mxu0 %v297
        %380 = vmatprep.subr.mxu0 0.0
        %381 = vmatpush1.msra.mxu0 %v298
        %382 = vmatprep.subr.mxu0 0.0
        %383 = vmatpush1.msra.mxu0 0.0
        %384 = vmatprep.subr.mxu0 0.0
        %385 = vmatpush1.msra.mxu0 0.0
        %386 = vmatprep.subr.mxu0 0.0
        %387 = vmatpush1.msra.mxu0 0.0
        %388 = vmatprep.subr.mxu0 0.0
        %389 = vmatpush1.msra.mxu0 0.0
        %390 = vmatprep.subr.mxu0 0.0
        %391 = vmatpush1.msra.mxu0 0.0
        %392 = vmatprep.subr.mxu0 0.0
        %393 = vmatpush1.msra.mxu0 0.0
        %394 = vmatprep.subr.mxu0 0.0
        %395 = vmatpush1.msra.mxu0 0.0
        %396 = vmatprep.subr.mxu0 0.0
        %397 = vmatpush1.msra.mxu0 0.0
        %398 = vmatprep.subr.mxu0 0.0
        %399 = vmatpush1.msra.mxu0 0.0
        %400 = vmatprep.subr.mxu0 0.0
        %401 = vmatpush1.msra.mxu0 0.0
        %402 = vmatprep.subr.mxu0 0.0
        %403 = vmatpush1.msra.mxu0 0.0
        %404 = vmatprep.subr.mxu0 0.0
        %405 = vmatpush1.msra.mxu0 0.0
        %406 = vmatprep.subr.mxu0 0.0
        %407 = vmatpush1.msra.mxu0 0.0
        %408 = vmatprep.subr.mxu0 0.0
        %409 = vmatpush1.msra.mxu0 0.0
        %410 = vmatprep.subr.mxu0 0.0
        %411 = vmatpush1.msra.mxu0 0.0
        %412 = vmatprep.subr.mxu0 0.0
        %413 = vmatpush1.msra.mxu0 0.0
        %414 = vmatprep.subr.mxu0 0.0
        %415 = vmatpush1.msra.mxu0 0.0
        %416 = vmatprep.subr.mxu0 0.0
        %417 = vmatpush1.msra.mxu0 0.0
        %418 = vmatprep.subr.mxu0 0.0
        %419 = vmatpush1.msra.mxu0 0.0
        %420 = vmatprep.subr.mxu0 0.0
        %421 = vmatpush1.msra.mxu0 0.0
        %422 = vmatprep.subr.mxu0 0.0
        %423 = vmatpush1.msra.mxu0 0.0
        %424 = vmatprep.subr.mxu0 0.0
        %425 = vmatpush1.msra.mxu0 0.0
        %426 = vmatprep.subr.mxu0 0.0
        %427 = vmatpush1.msra.mxu0 0.0
        %428 = vmatprep.subr.mxu0 0.0
        %429 = vmatpush1.msra.mxu0 0.0
        %430 = vmatprep.mubr.f32.mxu0 0.0
        %431 = vmatmul.mubr.f32.gmra.mrb[0].mxu0 %v364
        %v432 = vpop.f32.mrb[0].mxu0
        %v433 = vadd.f32 %v299, %v432
        %v434 = vpop.f32.mrb[0].mxu0
        %435 = vdwg.mxu0
        %v436 = vmax.f32 %v433, 0.0
        %v437 = vld [vmem:[%s3] sm:$0xff]
        %v438 = vld [vmem:[%s3 + $0x8] sm:$0xff]
        %v439 = vld [vmem:[%s4] sm:$0x1]
        %vm440 = vcmask 130048
        %v442 = vsel %vm440, %v436, 0
        %444 = vmatprep.subr.mxu0 0.0
        %445 = vmatpush1.msra.mxu0 %v437
        %446 = vmatprep.subr.mxu0 0.0
        %447 = vmatpush1.msra.mxu0 %v438
        %448 = vmatprep.subr.mxu0 0.0
        %449 = vmatpush1.msra.mxu0 0.0
        %450 = vmatprep.subr.mxu0 0.0
        %451 = vmatpush1.msra.mxu0 0.0
        %452 = vmatprep.subr.mxu0 0.0
        %453 = vmatpush1.msra.mxu0 0.0
        %454 = vmatprep.subr.mxu0 0.0
        %455 = vmatpush1.msra.mxu0 0.0
        %456 = vmatprep.subr.mxu0 0.0
        %457 = vmatpush1.msra.mxu0 0.0
        %458 = vmatprep.subr.mxu0 0.0
        %459 = vmatpush1.msra.mxu0 0.0
        %460 = vmatprep.subr.mxu0 0.0
        %461 = vmatpush1.msra.mxu0 0.0
        %462 = vmatprep.subr.mxu0 0.0
        %463 = vmatpush1.msra.mxu0 0.0
        %464 = vmatprep.subr.mxu0 0.0
        %465 = vmatpush1.msra.mxu0 0.0
        %466 = vmatprep.subr.mxu0 0.0
        %467 = vmatpush1.msra.mxu0 0.0
        %468 = vmatprep.subr.mxu0 0.0
        %469 = vmatpush1.msra.mxu0 0.0
        %470 = vmatprep.subr.mxu0 0.0
        %471 = vmatpush1.msra.mxu0 0.0
        %472 = vmatprep.subr.mxu0 0.0
        %473 = vmatpush1.msra.mxu0 0.0
        %474 = vmatprep.subr.mxu0 0.0
        %475 = vmatpush1.msra.mxu0 0.0
        %476 = vmatprep.subr.mxu0 0.0
        %477 = vmatpush1.msra.mxu0 0.0
        %478 = vmatprep.subr.mxu0 0.0
        %479 = vmatpush1.msra.mxu0 0.0
        %480 = vmatprep.subr.mxu0 0.0
        %481 = vmatpush1.msra.mxu0 0.0
        %482 = vmatprep.subr.mxu0 0.0
        %483 = vmatpush1.msra.mxu0 0.0
        %484 = vmatprep.subr.mxu0 0.0
        %485 = vmatpush1.msra.mxu0 0.0
        %486 = vmatprep.subr.mxu0 0.0
        %487 = vmatpush1.msra.mxu0 0.0
        %488 = vmatprep.subr.mxu0 0.0
        %489 = vmatpush1.msra.mxu0 0.0
        %490 = vmatprep.subr.mxu0 0.0
        %491 = vmatpush1.msra.mxu0 0.0
        %492 = vmatprep.subr.mxu0 0.0
        %493 = vmatpush1.msra.mxu0 0.0
        %494 = vmatprep.subr.mxu0 0.0
        %495 = vmatpush1.msra.mxu0 0.0
        %496 = vmatprep.subr.mxu0 0.0
        %497 = vmatpush1.msra.mxu0 0.0
        %498 = vmatprep.subr.mxu0 0.0
        %499 = vmatpush1.msra.mxu0 0.0
        %500 = vmatprep.subr.mxu0 0.0
        %501 = vmatpush1.msra.mxu0 0.0
        %502 = vmatprep.subr.mxu0 0.0
        %503 = vmatpush1.msra.mxu0 0.0
        %504 = vmatprep.subr.mxu0 0.0
        %505 = vmatpush1.msra.mxu0 0.0
        %506 = vmatprep.subr.mxu0 0.0
        %507 = vmatpush1.msra.mxu0 0.0
        %508 = vmatprep.mubr.f32.mxu0 0.0
        %509 = vmatmul.mubr.f32.gmra.mrb[0].mxu0 %v442
        %v510 = vpop.f32.mrb[0].mxu0
        %v511 = vadd.f32 %v439, %v510
        %v512 = vpop.f32.mrb[0].mxu0
        %513 = vdwg.mxu0
        %v514 = vxor.u32 %v511, 2147483648
        %v515 = vmul.f32 %v514, 1.442695
        %v516 = vpow.pop %v515
        %v517 = vadd.f32 %v516, 1.0
        %v518 = vrcp.pop %v517
        %v519 = vmul.f32 1.0, %v518
        %v520 = vlaneseq
        %v521 = vshrl.u32 %v520, 7
        %v522 = vsub.s32 0, %v521
        %v523 = vrot.slane %v519, %v522
        %525 = vbcast.lane.b32.xlu0 %v523, 256
        %v526 = vpop.permute.xlu0 %525
        %s528 = sor.u32 256, 8
        %529 = vbcast.lane.b32.xlu0 %v523, %s528
        %v530 = vpop.permute.xlu0 %529
        %s532 = sor.u32 256, 16
        %533 = vbcast.lane.b32.xlu0 %v523, %s532
        %v534 = vpop.permute.xlu0 %533
        %s536 = sor.u32 256, 24
        %537 = vbcast.lane.b32.xlu0 %v523, %s536
        %v538 = vpop.permute.xlu0 %537
        %s540 = sor.u32 256, 32
        %541 = vbcast.lane.b32.xlu0 %v523, %s540
        %v542 = vpop.permute.xlu0 %541
        %s544 = sor.u32 256, 40
        %545 = vbcast.lane.b32.xlu0 %v523, %s544
        %v546 = vpop.permute.xlu0 %545
        %s548 = sor.u32 256, 48
        %549 = vbcast.lane.b32.xlu0 %v523, %s548
        %v550 = vpop.permute.xlu0 %549
        %s552 = sor.u32 256, 56
        %553 = vbcast.lane.b32.xlu0 %v523, %s552
        %v554 = vpop.permute.xlu0 %553
        %v555 = vmul.f32 %v243, %v526
        %v556 = vmul.f32 %v244, %v526
        %v557 = vmul.f32 %v245, %v530
        %v558 = vmul.f32 %v246, %v530
        %v559 = vmul.f32 %v247, %v534
        %v560 = vmul.f32 %v248, %v534
        %v561 = vmul.f32 %v249, %v538
        %v562 = vmul.f32 %v250, %v538
        %v563 = vmul.f32 %v251, %v542
        %v564 = vmul.f32 %v252, %v542
        %v565 = vmul.f32 %v253, %v546
        %v566 = vmul.f32 %v254, %v546
        %v567 = vmul.f32 %v255, %v550
        %v568 = vmul.f32 %v256, %v550
        %v569 = vmul.f32 %v257, %v554
        %v570 = vmul.f32 %v258, %v554
        %571 = vst [vmem:[%s242] sm:$0xff] %v555
        %572 = vst [vmem:[%s242 + $0x8] sm:$0xff] %v556
        %573 = vst [vmem:[%s242 + $0x10] sm:$0xff] %v557
        %574 = vst [vmem:[%s242 + $0x18] sm:$0xff] %v558
        %575 = vst [vmem:[%s242 + $0x20] sm:$0xff] %v559
        %576 = vst [vmem:[%s242 + $0x28] sm:$0xff] %v560
        %577 = vst [vmem:[%s242 + $0x30] sm:$0xff] %v561
        %578 = vst [vmem:[%s242 + $0x38] sm:$0xff] %v562
        %579 = vst [vmem:[%s242 + $0x40] sm:$0xff] %v563
        %580 = vst [vmem:[%s242 + $0x48] sm:$0xff] %v564
        %581 = vst [vmem:[%s242 + $0x50] sm:$0xff] %v565
        %582 = vst [vmem:[%s242 + $0x58] sm:$0xff] %v566
        %583 = vst [vmem:[%s242 + $0x60] sm:$0xff] %v567
        %584 = vst [vmem:[%s242 + $0x68] sm:$0xff] %v568
        %585 = vst [vmem:[%s242 + $0x70] sm:$0xff] %v569
        %586 = vst [vmem:[%s242 + $0x78] sm:$0xff] %v570
        %s587 = sand.u32 %s140, 1
        %s588 = scalar_lea.sflag [#allocation4], %s587
        %s589 = sand.u32 %s140, 1
        %s590 = smul.addr %s589, 128
        %s591 = scalar_lea.vmem [#allocation5], %s590
        // Predicated region
        $region45: #{tpu_custom_call.1} parent=39 // pred_check
          %p592 = pneg %p150
        $region46: #{tpu_custom_call.1} parent=39 // pred_check_branch
          %594 = sbr.rel (%p592) target = $region48
        $region47: #{tpu_custom_call.1} parent=39 // pred_region
          %s596 = ssub.s32 2048, 2048
          %597 = vsyncadd %s588, %s596
          %s598 = smul.addr %s22, 16
          %s599 = smul.addr %s598, 128
          %s600 = scalar_lea.hbm %s5, %s599
          %s601 = sshll.u32 %s591, 4
          %s602 = int_to_ptr.vmem [resolvable:$true] %s601
          %607 = dma.vmem_to_hbm [thread:$0]  %s602, 2048, %s600, %s588, 256, 256, 16
        $region48: #{tpu_custom_call.1} parent=39 // pred_fallthru
          _
      $region40: #{tpu_custom_call.1} parent=5 // pred_fallthru
        _
      %p608 = scmp.le.s32.totalorder 2, %s17
      // Predicated region
      $region49: #{tpu_custom_call.1} parent=5 // pred_check
        %p609 = pneg %p608
      $region50: #{tpu_custom_call.1} parent=5 // pred_check_branch
        %611 = sbr.rel (%p609) target = $region52
      $region51: #{tpu_custom_call.1} parent=5 // pred_region
        %s612 = ssub.s32 %s17, 2
        // Predicated region
        $region53: #{tpu_custom_call.1} parent=51 // pred_check
          %p613 = pneg %p156
        $region54: #{tpu_custom_call.1} parent=51 // pred_check_branch
          %615 = sbr.rel (%p613) target = $region56
        $region55: #{tpu_custom_call.1} parent=51 // pred_region
          %s616 = sand.u32 %s141, 1
          %s617 = scalar_lea.sflag [#allocation4], %s616
          %s618 = sand.u32 %s141, 1
          %s619 = smul.addr %s618, 128
          %s620 = scalar_lea.vmem [#allocation5], %s619
          %621 = dma.done %s617, 2048
        $region56: #{tpu_custom_call.1} parent=51 // pred_fallthru
          _
      $region52: #{tpu_custom_call.1} parent=5 // pred_fallthru
        _
    $region6: #{tpu_custom_call.1} parent=1 // loop_footer
      %s21 = sadd.s32 1, %s17
    $region7: #{tpu_custom_call.1} parent=1 // loop_footer_branch
      %16 = sbr.rel target = $region3
    $region8: #{tpu_custom_call.1} parent=1 // loop_exit
      _
    %622 = vsyncpa [#allocation3], 1
    %s623 = scalar_lea.sflag [#allocation3], 1
    %624 = vsyncpa %s623, 1
    %625 = vsyncpa [#allocation4], 1
    %s626 = scalar_lea.sflag [#allocation4], 1
    %627 = vsyncpa %s626, 1

</llo_original>
